<compile_context>
chip_gen: v7x
topology: tpu7x:2x2x1
jax: 0.10.0
libtpu: 0.0.40
codegen_flags: <defaults>
</compile_context>

<pallas_src>
import functools

import jax
import jax.numpy as jnp
from jax.experimental import pallas as pl


def _conv2d_kernel(x_ref, w_ref, b_ref, o_ref, *, kh_size, ho, stride):
    """Conv2d forward as KH accumulating MXU dots with batch folded into M.

    x_ref : (N, Hp, Wp*Cin)        padded input, W*Cin packed on the lane axis
    w_ref : (KH, Wp*Cin, Wo*Cout)  width-Toeplitz weights, pre-split per kh
    b_ref : (1, Wo*Cout)           bias tiled across Wo
    o_ref : (N*Ho, Wo*Cout)        lane-dense output block
    """
    n = x_ref.shape[0]
    k = x_ref.shape[2]
    nout = w_ref.shape[2]

    acc = jnp.zeros((n * ho, nout), jnp.float32)
    for khi in range(kh_size):                          # small static loop (KH)
        if stride == 1:
            slab = x_ref[:, khi:khi + ho, :]            # (N, Ho, Wp*Cin)
        else:
            # General-stride path (not exercised by this module config).
            slab = x_ref[:, pl.ds(khi, ho, stride=stride), :]
        a = slab.reshape(n * ho, k)                     # fold batch into M (Ho % 8 == 0)
        acc = acc + jax.lax.dot_general(                # one K=72 MXU pass
            a, w_ref[khi],
            dimension_numbers=(((1,), (0,)), ((), ())),
            preferred_element_type=jnp.float32)
    o_ref[...] = (acc + b_ref[...]).astype(o_ref.dtype)


def precompute_conv_params(w_oihw, bias, *, input_hw, stride=1, padding=0):
    """Parameter-side transform, done ONCE when the weights are set.

    Builds the width-Toeplitz expansion of the Conv2d weight,
      B[kh, w_in*Cin + ci, wo*Cout + co] = w[co, ci, kh, w_in - wo*stride]
        when 0 <= w_in - wo*stride < KW, else 0,
    pre-split per kh, and the Wo-tiled bias.  Hoisting this gather+select op
    chain out of the per-forward path removes work comparable in cost to the
    conv itself at this size.
    """
    cout, cin, kh, kw = w_oihw.shape
    h, w = input_hw
    wp = w + 2 * padding
    wo = (w + 2 * padding - kw) // stride + 1

    w_hwio = jnp.transpose(w_oihw, (2, 3, 1, 0))                        # (KH,KW,Cin,Cout)
    kw_idx = jnp.arange(wp)[:, None] - jnp.arange(wo)[None, :] * stride  # (Wp,Wo)
    valid = (kw_idx >= 0) & (kw_idx < kw)
    kw_safe = jnp.clip(kw_idx, 0, kw - 1)
    w_toep = w_hwio[:, kw_safe]                                         # (KH,Wp,Wo,Cin,Cout)
    w_toep = jnp.where(valid[None, :, :, None, None], w_toep, 0.0)
    w_toep = jnp.transpose(w_toep, (0, 1, 3, 2, 4))                     # (KH,Wp,Cin,Wo,Cout)
    w_toep = w_toep.reshape(kh, wp * cin, wo * cout)                    # (KH, 72, 128)

    b_tiled = jnp.tile(bias, wo).reshape(1, wo * cout)                  # (1, Wo*Cout)
    return w_toep, b_tiled


def conv2d_forward(x_nchw, w_toep, b_tiled, *, kernel_hw, stride=1, padding=0):
    """Per-forward hot path: NCHW->NHWC pad/pack glue + one pallas_call."""
    n, cin, h, w = x_nchw.shape
    kh, kw = kernel_hw
    ho = (h + 2 * padding - kh) // stride + 1
    wo = (w + 2 * padding - kw) // stride + 1
    hp, wp = h + 2 * padding, w + 2 * padding
    cout = b_tiled.shape[1] // wo
    assert w_toep.shape == (kh, wp * cin, wo * cout)

    # Thin JAX glue: NCHW -> NHWC, spatial zero-pad, W*Cin lane-pack (free reshape).
    x_nhwc = jnp.transpose(x_nchw, (0, 2, 3, 1))                        # (N,H,W,Cin)
    x_pad = jnp.pad(x_nhwc, ((0, 0), (padding, padding),
                             (padding, padding), (0, 0)))               # (N,Hp,Wp,Cin)
    x_packed = x_pad.reshape(n, hp, wp * cin)                           # (N,Hp,Wp*Cin)

    kernel = functools.partial(_conv2d_kernel, kh_size=kh, ho=ho, stride=stride)

    flops = 2 * n * ho * wo * kh * kw * cin * cout
    bytes_accessed = 4 * (x_packed.size + w_toep.size + b_tiled.size
                          + n * ho * wo * cout)

    # Single step (no grid): the batch is folded into the matmul M axis inside
    # the kernel, all operands (<0.2 MB total) sit in VMEM once, nothing is
    # pipelined and nothing is double-buffered.
    # TODO(synk): for large layers (e.g. 56x56, Cin=Cout=64) the Toeplitz
    # weight exceeds VMEM (especially v7x's 64 MiB); before scaling this up,
    # add a K-tiled "arbitrary" grid axis with a VMEM scratch accumulator and
    # tile w_toep over (K_tile, Wo*Cout) blocks.
    out2d = pl.pallas_call(
        kernel,
        out_shape=jax.ShapeDtypeStruct((n * ho, wo * cout), jnp.float32),
        cost_estimate=pl.CostEstimate(
            flops=flops, transcendentals=0, bytes_accessed=bytes_accessed),
    )(x_packed, w_toep, b_tiled)

    # (N*Ho, Wo*Cout) -> (N, Ho, Wo, Cout) is a free reshape; then back to NCHW.
    return jnp.transpose(out2d.reshape(n, ho, wo, cout), (0, 3, 1, 2))


if __name__ == "__main__":
    # Module config: SimpleCNN(in_channels=4, out_channels=8, kernel_size=3,
    #                          stride=1, padding=1)
    in_channels, out_channels, kernel_size, stride, padding = 4, 8, 3, 1, 1
    N, H, W = 2, 16, 16

    key = jax.random.PRNGKey(0)
    kx, kw_, kb = jax.random.split(key, 3)

    x = jax.random.normal(kx, (N, in_channels, H, W), dtype=jnp.float32)
    # Deterministic parameter init (synthetic; mimics Conv2d's uniform scale).
    fan_in = in_channels * kernel_size * kernel_size
    bound = 1.0 / (fan_in ** 0.5)
    weight = jax.random.uniform(
        kw_, (out_channels, in_channels, kernel_size, kernel_size),
        dtype=jnp.float32, minval=-bound, maxval=bound)
    bias = jax.random.uniform(
        kb, (out_channels,), dtype=jnp.float32, minval=-bound, maxval=bound)

    # Toeplitz weight expansion happens ONCE here, outside the hot path
    # (in a real model it would be cached next to the module parameters).
    w_toep, b_tiled = precompute_conv_params(
        weight, bias, input_hw=(H, W), stride=stride, padding=padding)
    w_toep, b_tiled = jax.block_until_ready((w_toep, b_tiled))

    forward = jax.jit(functools.partial(
        conv2d_forward, kernel_hw=(kernel_size, kernel_size),
        stride=stride, padding=padding))

    out = forward(x, w_toep, b_tiled)
    out = jax.block_until_ready(out)

    # Cross-check against XLA's conv for correctness.
    ref = jax.lax.conv_general_dilated(
        x, weight, window_strides=(stride, stride),
        padding=[(padding, padding), (padding, padding)],
        dimension_numbers=("NCHW", "OIHW", "NCHW")) + bias.reshape(1, -1, 1, 1)
    assert out.shape == (N, out_channels, H, W), out.shape
    assert jnp.allclose(out, ref, atol=1e-4, rtol=1e-4), "mismatch vs XLA conv"

    print("KERNEL_OK")
</pallas_src>

<mosaic_0001>
module attributes {stable_mosaic.version = 11 : i64} {
  func.func @_conv2d_kernel(%arg0: memref<2x18x72xf32, #tpu.memory_space<vmem>>, %arg1: memref<3x72x128xf32, #tpu.memory_space<vmem>>, %arg2: memref<1x128xf32, #tpu.memory_space<vmem>>, %arg3: memref<32x128xf32, #tpu.memory_space<vmem>>) attributes {dimension_semantics = [], scalar_prefetch = 0 : i64, scratch_operands = 0 : i64, tpu.core_type = #tpu.core_type<tc>} {
    %cst = arith.constant 0.000000e+00 : f32
    %0 = vector.broadcast %cst : f32 to vector<32x128xf32>
    %c0 = arith.constant 0 : index
    %c0_0 = arith.constant 0 : index
    %c0_1 = arith.constant 0 : index
    %1 = vector.load %arg0[%c0, %c0_0, %c0_1] : memref<2x18x72xf32, #tpu.memory_space<vmem>>, vector<2x16x72xf32>
    %2 = vector.shape_cast %1 : vector<2x16x72xf32> to vector<32x72xf32>
    %c0_2 = arith.constant 0 : index
    %c0_3 = arith.constant 0 : index
    %c0_4 = arith.constant 0 : index
    %3 = vector.load %arg1[%c0_2, %c0_3, %c0_4] : memref<3x72x128xf32, #tpu.memory_space<vmem>>, vector<1x72x128xf32>
    %4 = vector.shape_cast %3 : vector<1x72x128xf32> to vector<72x128xf32>
    %cst_5 = arith.constant dense<0.000000e+00> : vector<32x128xf32>
    %5 = tpu.matmul %2, %4, %cst_5 {dimension_numbers = #tpu.dot_dimension_numbers<[1], [0], [0], [1], [0, 0, 1, 1], [], []>} : vector<32x72xf32>, vector<72x128xf32>, vector<32x128xf32> -> vector<32x128xf32>
    %6 = arith.addf %0, %5 : vector<32x128xf32>
    %c0_6 = arith.constant 0 : index
    %c1 = arith.constant 1 : index
    %c0_7 = arith.constant 0 : index
    %7 = vector.load %arg0[%c0_6, %c1, %c0_7] : memref<2x18x72xf32, #tpu.memory_space<vmem>>, vector<2x16x72xf32>
    %8 = vector.shape_cast %7 : vector<2x16x72xf32> to vector<32x72xf32>
    %c1_8 = arith.constant 1 : index
    %c0_9 = arith.constant 0 : index
    %c0_10 = arith.constant 0 : index
    %9 = vector.load %arg1[%c1_8, %c0_9, %c0_10] : memref<3x72x128xf32, #tpu.memory_space<vmem>>, vector<1x72x128xf32>
    %10 = vector.shape_cast %9 : vector<1x72x128xf32> to vector<72x128xf32>
    %cst_11 = arith.constant dense<0.000000e+00> : vector<32x128xf32>
    %11 = tpu.matmul %8, %10, %cst_11 {dimension_numbers = #tpu.dot_dimension_numbers<[1], [0], [0], [1], [0, 0, 1, 1], [], []>} : vector<32x72xf32>, vector<72x128xf32>, vector<32x128xf32> -> vector<32x128xf32>
    %12 = arith.addf %6, %11 : vector<32x128xf32>
    %c0_12 = arith.constant 0 : index
    %c2 = arith.constant 2 : index
    %c0_13 = arith.constant 0 : index
    %13 = vector.load %arg0[%c0_12, %c2, %c0_13] : memref<2x18x72xf32, #tpu.memory_space<vmem>>, vector<2x16x72xf32>
    %14 = vector.shape_cast %13 : vector<2x16x72xf32> to vector<32x72xf32>
    %c2_14 = arith.constant 2 : index
    %c0_15 = arith.constant 0 : index
    %c0_16 = arith.constant 0 : index
    %15 = vector.load %arg1[%c2_14, %c0_15, %c0_16] : memref<3x72x128xf32, #tpu.memory_space<vmem>>, vector<1x72x128xf32>
    %16 = vector.shape_cast %15 : vector<1x72x128xf32> to vector<72x128xf32>
    %cst_17 = arith.constant dense<0.000000e+00> : vector<32x128xf32>
    %17 = tpu.matmul %14, %16, %cst_17 {dimension_numbers = #tpu.dot_dimension_numbers<[1], [0], [0], [1], [0, 0, 1, 1], [], []>} : vector<32x72xf32>, vector<72x128xf32>, vector<32x128xf32> -> vector<32x128xf32>
    %18 = arith.addf %12, %17 : vector<32x128xf32>
    %c0_18 = arith.constant 0 : index
    %c0_19 = arith.constant 0 : index
    %19 = vector.load %arg2[%c0_18, %c0_19] : memref<1x128xf32, #tpu.memory_space<vmem>>, vector<1x128xf32>
    %20 = vector.broadcast %19 : vector<1x128xf32> to vector<32x128xf32>
    %21 = arith.addf %18, %20 : vector<32x128xf32>
    %c0_20 = arith.constant 0 : index
    %c0_21 = arith.constant 0 : index
    %22 = vector.load %arg3[%c0_20, %c0_21] : memref<32x128xf32, #tpu.memory_space<vmem>>, vector<32x128xf32>
    tpu.vector_store %arg3[%c0_20, %c0_21], %21 {strides = array<i32>} : memref<32x128xf32, #tpu.memory_space<vmem>>, vector<32x128xf32>,
    return
  }
}

</mosaic_0001>

<llo_original>
// kernel: conv2d_forward.1
$region0: #{conv2d_forward.1}
  #allocation0 [shape = 'u32[]', space=smem, size = 0x4, offset = 0x4, fixed_abs, tag = 'smem constant byte address 0x4 - core index']
  #allocation1 [shape = 'u32[144,128]{1,0:T(1,128)}', space=vmem, size = 0x12000, scoped, tag = 'internal scratch']
  %s0 = inlined_call_operand.vmem [shape: f32[2,18,72], index: 0, kind: input, shape index: {}]
  %s1 = inlined_call_operand.vmem [shape: f32[3,72,128], index: 1, kind: input, shape index: {}]
  %s2 = inlined_call_operand.vmem [shape: f32[1,128], index: 2, kind: input, shape index: {}]
  %s3 = inlined_call_operand.vmem [shape: f32[32,128], index: 3, kind: output, shape index: {}]
  %s4 = sld [smem:[#allocation0]]
  $region22: #{conv2d_forward.1} parent=0
    _
  %s6 = ssub.s32 1, %s4
  %s7 = scalar_select 0, %s6, %s4
  // Predicated region
  $region2: #{conv2d_forward.1} parent=0 // pred_check
    _
  $region3: #{conv2d_forward.1} parent=0 // pred_check_branch
    %9 = sbr.rel (0) target = $region5
  $region4: #{conv2d_forward.1} parent=0 // pred_region
    _
  $region5: #{conv2d_forward.1} parent=0 // pred_fallthru
    _
  // Predicated region
  $region6: #{conv2d_forward.1} parent=0 // pred_check
    _
  $region7: #{conv2d_forward.1} parent=0 // pred_check_branch
    %11 = sbr.rel (0) target = $region9
  $region8: #{conv2d_forward.1} parent=0 // pred_region
    _
  $region9: #{conv2d_forward.1} parent=0 // pred_fallthru
    _
  // Predicated region
  $region10: #{conv2d_forward.1} parent=0 // pred_check
    _
  $region11: #{conv2d_forward.1} parent=0 // pred_check_branch
    %13 = sbr.rel (0) target = $region13
  $region12: #{conv2d_forward.1} parent=0 // pred_region
    _
  $region13: #{conv2d_forward.1} parent=0 // pred_fallthru
    _
  %v14 = vld [vmem:[%s0] sm:$0xff]
  %v15 = vld [vmem:[%s0 + $0x8] sm:$0xff]
  %v16 = vld [vmem:[%s0 + $0x18] sm:$0xff]
  %v17 = vld [vmem:[%s0 + $0x20] sm:$0xff]
  %v18 = vld [vmem:[%s1] sm:$0xff]
  %v19 = vld [vmem:[%s1 + $0x8] sm:$0xff]
  %v20 = vld [vmem:[%s1 + $0x10] sm:$0xff]
  %v21 = vld [vmem:[%s1 + $0x18] sm:$0xff]
  %v22 = vld [vmem:[%s1 + $0x20] sm:$0xff]
  %v23 = vld [vmem:[%s1 + $0x28] sm:$0xff]
  %v24 = vld [vmem:[%s1 + $0x30] sm:$0xff]
  %v25 = vld [vmem:[%s1 + $0x38] sm:$0xff]
  %v26 = vld [vmem:[%s1 + $0x40] sm:$0xff]
  %v27 = vld [vmem:[%s0 + $0x1] sm:$0xff]
  %v28 = vld [vmem:[%s0 + $0x9] sm:$0xff]
  %v29 = vld [vmem:[%s0 + $0x19] sm:$0xff]
  %v30 = vld [vmem:[%s0 + $0x21] sm:$0xff]
  %s31 = scalar_lea.vmem %s1, 72
  %v32 = vld [vmem:[%s31] sm:$0xff]
  %v33 = vld [vmem:[%s31 + $0x8] sm:$0xff]
  %v34 = vld [vmem:[%s31 + $0x10] sm:$0xff]
  %v35 = vld [vmem:[%s31 + $0x18] sm:$0xff]
  %v36 = vld [vmem:[%s31 + $0x20] sm:$0xff]
  %v37 = vld [vmem:[%s31 + $0x28] sm:$0xff]
  %v38 = vld [vmem:[%s31 + $0x30] sm:$0xff]
  %v39 = vld [vmem:[%s31 + $0x38] sm:$0xff]
  %v40 = vld [vmem:[%s31 + $0x40] sm:$0xff]
  %vm41 = vcmask 588800
  %v43 = vsel %vm41, %v27, 0
  %v46 = vsel %vm41, %v28, 0
  %v49 = vsel %vm41, %v29, 0
  %v52 = vsel %vm41, %v30, 0
  %54 = vmatprep.subr.mxu0 0.0
  %55 = vmatpush1.msra.mxu0 %v32
  %56 = vmatprep.subr.mxu0 0.0
  %57 = vmatpush1.msra.mxu0 %v33
  %58 = vmatprep.subr.mxu0 0.0
  %59 = vmatpush1.msra.mxu0 %v34
  %60 = vmatprep.subr.mxu0 0.0
  %61 = vmatpush1.msra.mxu0 %v35
  %62 = vmatprep.subr.mxu0 0.0
  %63 = vmatpush1.msra.mxu0 %v36
  %64 = vmatprep.subr.mxu0 0.0
  %65 = vmatpush1.msra.mxu0 %v37
  %66 = vmatprep.subr.mxu0 0.0
  %67 = vmatpush1.msra.mxu0 %v38
  %68 = vmatprep.subr.mxu0 0.0
  %69 = vmatpush1.msra.mxu0 %v39
  %70 = vmatprep.subr.mxu0 0.0
  %71 = vmatpush1.msra.mxu0 %v40
  %72 = vmatprep.subr.mxu0 0.0
  %73 = vmatpush1.msra.mxu0 0.0
  %74 = vmatprep.subr.mxu0 0.0
  %75 = vmatpush1.msra.mxu0 0.0
  %76 = vmatprep.subr.mxu0 0.0
  %77 = vmatpush1.msra.mxu0 0.0
  %78 = vmatprep.subr.mxu0 0.0
  %79 = vmatpush1.msra.mxu0 0.0
  %80 = vmatprep.subr.mxu0 0.0
  %81 = vmatpush1.msra.mxu0 0.0
  %82 = vmatprep.subr.mxu0 0.0
  %83 = vmatpush1.msra.mxu0 0.0
  %84 = vmatprep.subr.mxu0 0.0
  %85 = vmatpush1.msra.mxu0 0.0
  %86 = vmatprep.subr.mxu0 0.0
  %87 = vmatpush1.msra.mxu0 0.0
  %88 = vmatprep.subr.mxu0 0.0
  %89 = vmatpush1.msra.mxu0 0.0
  %90 = vmatprep.subr.mxu0 0.0
  %91 = vmatpush1.msra.mxu0 0.0
  %92 = vmatprep.subr.mxu0 0.0
  %93 = vmatpush1.msra.mxu0 0.0
  %94 = vmatprep.subr.mxu0 0.0
  %95 = vmatpush1.msra.mxu0 0.0
  %96 = vmatprep.subr.mxu0 0.0
  %97 = vmatpush1.msra.mxu0 0.0
  %98 = vmatprep.subr.mxu0 0.0
  %99 = vmatpush1.msra.mxu0 0.0
  %100 = vmatprep.subr.mxu0 0.0
  %101 = vmatpush1.msra.mxu0 0.0
  %102 = vmatprep.subr.mxu0 0.0
  %103 = vmatpush1.msra.mxu0 0.0
  %104 = vmatprep.subr.mxu0 0.0
  %105 = vmatpush1.msra.mxu0 0.0
  %106 = vmatprep.subr.mxu0 0.0
  %107 = vmatpush1.msra.mxu0 0.0
  %108 = vmatprep.subr.mxu0 0.0
  %109 = vmatpush1.msra.mxu0 0.0
  %110 = vmatprep.subr.mxu0 0.0
  %111 = vmatpush1.msra.mxu0 0.0
  %112 = vmatprep.subr.mxu0 0.0
  %113 = vmatpush1.msra.mxu0 0.0
  %114 = vmatprep.subr.mxu0 0.0
  %115 = vmatpush1.msra.mxu0 0.0
  %116 = vmatprep.subr.mxu0 0.0
  %117 = vmatpush1.msra.mxu0 0.0
  %118 = vmatprep.mubr.f32.mxu0 0.0
  %119 = vmatmul.mubr.f32.gmra.mrb[0].mxu0 %v43
  %v120 = vpop.f32.mrb[0].mxu0
  %v121 = vadd.f32 0.0, %v120
  %v122 = vpop.f32.mrb[0].mxu0
  %123 = vmatprep.mubr.f32.mxu0 0.0
  %124 = vmatmul.mubr.f32.gmra.mrb[0].mxu0 %v46
  %v125 = vpop.f32.mrb[0].mxu0
  %v126 = vadd.f32 0.0, %v125
  %v127 = vpop.f32.mrb[0].mxu0
  %128 = vmatprep.mubr.f32.mxu0 0.0
  %129 = vmatmul.mubr.f32.gmra.mrb[0].mxu0 %v49
  %v130 = vpop.f32.mrb[0].mxu0
  %v131 = vadd.f32 0.0, %v130
  %v132 = vpop.f32.mrb[0].mxu0
  %133 = vmatprep.mubr.f32.mxu0 0.0
  %134 = vmatmul.mubr.f32.gmra.mrb[0].mxu0 %v52
  %v135 = vpop.f32.mrb[0].mxu0
  %v136 = vadd.f32 0.0, %v135
  %v137 = vpop.f32.mrb[0].mxu0
  %138 = vdwg.mxu0
  %v140 = vsel %vm41, %v14, 0
  %v143 = vsel %vm41, %v15, 0
  %v146 = vsel %vm41, %v16, 0
  %v149 = vsel %vm41, %v17, 0
  %151 = vmatprep.subr.mxu0 0.0
  %152 = vmatpush1.msra.mxu0 %v18
  %153 = vmatprep.subr.mxu0 0.0
  %154 = vmatpush1.msra.mxu0 %v19
  %155 = vmatprep.subr.mxu0 0.0
  %156 = vmatpush1.msra.mxu0 %v20
  %157 = vmatprep.subr.mxu0 0.0
  %158 = vmatpush1.msra.mxu0 %v21
  %159 = vmatprep.subr.mxu0 0.0
  %160 = vmatpush1.msra.mxu0 %v22
  %161 = vmatprep.subr.mxu0 0.0
  %162 = vmatpush1.msra.mxu0 %v23
  %163 = vmatprep.subr.mxu0 0.0
  %164 = vmatpush1.msra.mxu0 %v24
  %165 = vmatprep.subr.mxu0 0.0
  %166 = vmatpush1.msra.mxu0 %v25
  %167 = vmatprep.subr.mxu0 0.0
  %168 = vmatpush1.msra.mxu0 %v26
  %169 = vmatprep.subr.mxu0 0.0
  %170 = vmatpush1.msra.mxu0 0.0
  %171 = vmatprep.subr.mxu0 0.0
  %172 = vmatpush1.msra.mxu0 0.0
  %173 = vmatprep.subr.mxu0 0.0
  %174 = vmatpush1.msra.mxu0 0.0
  %175 = vmatprep.subr.mxu0 0.0
  %176 = vmatpush1.msra.mxu0 0.0
  %177 = vmatprep.subr.mxu0 0.0
  %178 = vmatpush1.msra.mxu0 0.0
  %179 = vmatprep.subr.mxu0 0.0
  %180 = vmatpush1.msra.mxu0 0.0
  %181 = vmatprep.subr.mxu0 0.0
  %182 = vmatpush1.msra.mxu0 0.0
  %183 = vmatprep.subr.mxu0 0.0
  %184 = vmatpush1.msra.mxu0 0.0
  %185 = vmatprep.subr.mxu0 0.0
  %186 = vmatpush1.msra.mxu0 0.0
  %187 = vmatprep.subr.mxu0 0.0
  %188 = vmatpush1.msra.mxu0 0.0
  %189 = vmatprep.subr.mxu0 0.0
  %190 = vmatpush1.msra.mxu0 0.0
  %191 = vmatprep.subr.mxu0 0.0
  %192 = vmatpush1.msra.mxu0 0.0
  %193 = vmatprep.subr.mxu0 0.0
  %194 = vmatpush1.msra.mxu0 0.0
  %195 = vmatprep.subr.mxu0 0.0
  %196 = vmatpush1.msra.mxu0 0.0
  %197 = vmatprep.subr.mxu0 0.0
  %198 = vmatpush1.msra.mxu0 0.0
  %199 = vmatprep.subr.mxu0 0.0
  %200 = vmatpush1.msra.mxu0 0.0
  %201 = vmatprep.subr.mxu0 0.0
  %202 = vmatpush1.msra.mxu0 0.0
  %203 = vmatprep.subr.mxu0 0.0
  %204 = vmatpush1.msra.mxu0 0.0
  %205 = vmatprep.subr.mxu0 0.0
  %206 = vmatpush1.msra.mxu0 0.0
  %207 = vmatprep.subr.mxu0 0.0
  %208 = vmatpush1.msra.mxu0 0.0
  %209 = vmatprep.subr.mxu0 0.0
  %210 = vmatpush1.msra.mxu0 0.0
  %211 = vmatprep.subr.mxu0 0.0
  %212 = vmatpush1.msra.mxu0 0.0
  %213 = vmatprep.subr.mxu0 0.0
  %214 = vmatpush1.msra.mxu0 0.0
  %215 = vmatprep.mubr.f32.mxu0 0.0
  %216 = vmatmul.mubr.f32.gmra.mrb[0].mxu0 %v140
  %v217 = vpop.f32.mrb[0].mxu0
  %v218 = vadd.f32 %v121, %v217
  %v219 = vpop.f32.mrb[0].mxu0
  %220 = vmatprep.mubr.f32.mxu0 0.0
  %221 = vmatmul.mubr.f32.gmra.mrb[0].mxu0 %v143
  %v222 = vpop.f32.mrb[0].mxu0
  %v223 = vadd.f32 %v126, %v222
  %v224 = vpop.f32.mrb[0].mxu0
  %225 = vmatprep.mubr.f32.mxu0 0.0
  %226 = vmatmul.mubr.f32.gmra.mrb[0].mxu0 %v146
  %v227 = vpop.f32.mrb[0].mxu0
  %v228 = vadd.f32 %v131, %v227
  %v229 = vpop.f32.mrb[0].mxu0
  %230 = vmatprep.mubr.f32.mxu0 0.0
  %231 = vmatmul.mubr.f32.gmra.mrb[0].mxu0 %v149
  %v232 = vpop.f32.mrb[0].mxu0
  %v233 = vadd.f32 %v136, %v232
  %v234 = vpop.f32.mrb[0].mxu0
  %235 = vdwg.mxu0
  %v236 = vld [vmem:[%s0 + $0x2] sm:$0xff]
  %v237 = vld [vmem:[%s0 + $0xa] sm:$0xff]
  %v238 = vld [vmem:[%s0 + $0x1a] sm:$0xff]
  %v239 = vld [vmem:[%s0 + $0x22] sm:$0xff]
  %s240 = scalar_lea.vmem %s1, 144
  %v241 = vld [vmem:[%s240] sm:$0xff]
  %v242 = vld [vmem:[%s240 + $0x8] sm:$0xff]
  %v243 = vld [vmem:[%s240 + $0x10] sm:$0xff]
  %v244 = vld [vmem:[%s240 + $0x18] sm:$0xff]
  %v245 = vld [vmem:[%s240 + $0x20] sm:$0xff]
  %v246 = vld [vmem:[%s240 + $0x28] sm:$0xff]
  %v247 = vld [vmem:[%s240 + $0x30] sm:$0xff]
  %v248 = vld [vmem:[%s240 + $0x38] sm:$0xff]
  %v249 = vld [vmem:[%s240 + $0x40] sm:$0xff]
  %v251 = vsel %vm41, %v236, 0
  %v254 = vsel %vm41, %v237, 0
  %v257 = vsel %vm41, %v238, 0
  %v260 = vsel %vm41, %v239, 0
  %262 = vmatprep.subr.mxu0 0.0
  %263 = vmatpush1.msra.mxu0 %v241
  %264 = vmatprep.subr.mxu0 0.0
  %265 = vmatpush1.msra.mxu0 %v242
  %266 = vmatprep.subr.mxu0 0.0
  %267 = vmatpush1.msra.mxu0 %v243
  %268 = vmatprep.subr.mxu0 0.0
  %269 = vmatpush1.msra.mxu0 %v244
  %270 = vmatprep.subr.mxu0 0.0
  %271 = vmatpush1.msra.mxu0 %v245
  %272 = vmatprep.subr.mxu0 0.0
  %273 = vmatpush1.msra.mxu0 %v246
  %274 = vmatprep.subr.mxu0 0.0
  %275 = vmatpush1.msra.mxu0 %v247
  %276 = vmatprep.subr.mxu0 0.0
  %277 = vmatpush1.msra.mxu0 %v248
  %278 = vmatprep.subr.mxu0 0.0
  %279 = vmatpush1.msra.mxu0 %v249
  %280 = vmatprep.subr.mxu0 0.0
  %281 = vmatpush1.msra.mxu0 0.0
  %282 = vmatprep.subr.mxu0 0.0
  %283 = vmatpush1.msra.mxu0 0.0
  %284 = vmatprep.subr.mxu0 0.0
  %285 = vmatpush1.msra.mxu0 0.0
  %286 = vmatprep.subr.mxu0 0.0
  %287 = vmatpush1.msra.mxu0 0.0
  %288 = vmatprep.subr.mxu0 0.0
  %289 = vmatpush1.msra.mxu0 0.0
  %290 = vmatprep.subr.mxu0 0.0
  %291 = vmatpush1.msra.mxu0 0.0
  %292 = vmatprep.subr.mxu0 0.0
  %293 = vmatpush1.msra.mxu0 0.0
  %294 = vmatprep.subr.mxu0 0.0
  %295 = vmatpush1.msra.mxu0 0.0
  %296 = vmatprep.subr.mxu0 0.0
  %297 = vmatpush1.msra.mxu0 0.0
  %298 = vmatprep.subr.mxu0 0.0
  %299 = vmatpush1.msra.mxu0 0.0
  %300 = vmatprep.subr.mxu0 0.0
  %301 = vmatpush1.msra.mxu0 0.0
  %302 = vmatprep.subr.mxu0 0.0
  %303 = vmatpush1.msra.mxu0 0.0
  %304 = vmatprep.subr.mxu0 0.0
  %305 = vmatpush1.msra.mxu0 0.0
  %306 = vmatprep.subr.mxu0 0.0
  %307 = vmatpush1.msra.mxu0 0.0
  %308 = vmatprep.subr.mxu0 0.0
  %309 = vmatpush1.msra.mxu0 0.0
  %310 = vmatprep.subr.mxu0 0.0
  %311 = vmatpush1.msra.mxu0 0.0
  %312 = vmatprep.subr.mxu0 0.0
  %313 = vmatpush1.msra.mxu0 0.0
  %314 = vmatprep.subr.mxu0 0.0
  %315 = vmatpush1.msra.mxu0 0.0
  %316 = vmatprep.subr.mxu0 0.0
  %317 = vmatpush1.msra.mxu0 0.0
  %318 = vmatprep.subr.mxu0 0.0
  %319 = vmatpush1.msra.mxu0 0.0
  %320 = vmatprep.subr.mxu0 0.0
  %321 = vmatpush1.msra.mxu0 0.0
  %322 = vmatprep.subr.mxu0 0.0
  %323 = vmatpush1.msra.mxu0 0.0
  %324 = vmatprep.subr.mxu0 0.0
  %325 = vmatpush1.msra.mxu0 0.0
  %326 = vmatprep.mubr.f32.mxu0 0.0
  %327 = vmatmul.mubr.f32.gmra.mrb[0].mxu0 %v251
  %v328 = vpop.f32.mrb[0].mxu0
  %v329 = vadd.f32 0.0, %v328
  %v330 = vpop.f32.mrb[0].mxu0
  %331 = vmatprep.mubr.f32.mxu0 0.0
  %332 = vmatmul.mubr.f32.gmra.mrb[0].mxu0 %v254
  %v333 = vpop.f32.mrb[0].mxu0
  %v334 = vadd.f32 0.0, %v333
  %v335 = vpop.f32.mrb[0].mxu0
  %336 = vmatprep.mubr.f32.mxu0 0.0
  %337 = vmatmul.mubr.f32.gmra.mrb[0].mxu0 %v257
  %v338 = vpop.f32.mrb[0].mxu0
  %v339 = vadd.f32 0.0, %v338
  %v340 = vpop.f32.mrb[0].mxu0
  %341 = vmatprep.mubr.f32.mxu0 0.0
  %342 = vmatmul.mubr.f32.gmra.mrb[0].mxu0 %v260
  %v343 = vpop.f32.mrb[0].mxu0
  %v344 = vadd.f32 0.0, %v343
  %v345 = vpop.f32.mrb[0].mxu0
  %346 = vdwg.mxu0
  %v347 = vadd.f32 %v218, %v329
  %v348 = vadd.f32 %v223, %v334
  %v349 = vadd.f32 %v228, %v339
  %v350 = vadd.f32 %v233, %v344
  %v351 = vld [vmem:[%s2] sm:$0x1]
  %v353 = vlaneseq
  %v354 = vshrl.u32 %v353, 7
  %v355 = vsub.s32 0, %v354
  %v356 = vrot.slane %v351, %v355
  %v358 = vadd.f32 %v347, %v356
  %v359 = vadd.f32 %v348, %v356
  %v360 = vadd.f32 %v349, %v356
  %v361 = vadd.f32 %v350, %v356
  %362 = vst [vmem:[%s3] sm:$0xff] %v358
  %363 = vst [vmem:[%s3 + $0x8] sm:$0xff] %v359
  %364 = vst [vmem:[%s3 + $0x10] sm:$0xff] %v360
  %365 = vst [vmem:[%s3 + $0x18] sm:$0xff] %v361
  // Predicated region
  $region14: #{conv2d_forward.1} parent=0 // pred_check
    _
  $region15: #{conv2d_forward.1} parent=0 // pred_check_branch
    %367 = sbr.rel (0) target = $region17
  $region16: #{conv2d_forward.1} parent=0 // pred_region
    _
  $region17: #{conv2d_forward.1} parent=0 // pred_fallthru
    _
  // Predicated region
  $region18: #{conv2d_forward.1} parent=0 // pred_check
    _
  $region19: #{conv2d_forward.1} parent=0 // pred_check_branch
    %369 = sbr.rel (0) target = $region21
  $region20: #{conv2d_forward.1} parent=0 // pred_region
    _
  $region21: #{conv2d_forward.1} parent=0 // pred_fallthru
    _

</llo_original>
